<compile_context>
chip_gen: v7x
topology: tpu7x:2x2x1
jax: 0.10.0
libtpu: 0.0.40
codegen_flags: <defaults>
</compile_context>

<pallas_src>
import functools

import jax
import jax.numpy as jnp
import numpy as np
from jax import lax
from jax.experimental import pallas as pl
from jax.experimental.pallas import tpu as pltpu

EPS = 1e-5  # matches torch.nn.LayerNorm default


def _layernorm_seg_kernel(x_ref, g_ref, b_ref, seg_ref, o_ref, *, d, eps,
                          hi_lo, bf16_epilogue):
    """(TM, DP) tile; 128//d logical rows live side-by-side in the 128 lanes.

    Per-logical-row sums are segmented sums over d-lane segments, computed as
    bf16 matmuls against a block-diagonal 0/1 matrix on the otherwise-idle MXU
    (f32 accumulation), keeping all cross-lane reductions off the VPU/XLU.
    """
    x = x_ref[...].astype(jnp.float32)       # (TM, DP)
    g = g_ref[...].astype(jnp.float32)       # (1, DP)
    b = b_ref[...].astype(jnp.float32)       # (1, DP)
    seg = seg_ref[...]                       # (DP, DP) bf16, exact 0/1

    def seg_sum(v):
        # (TM, DP) f32 -> per-segment sums broadcast back across each segment.
        if hi_lo:
            # f32 activations: manual hi/lo split gives ~f32-accurate sums
            # from two cheap bf16 MXU passes.
            v_hi = v.astype(jnp.bfloat16)
            v_lo = (v - v_hi.astype(jnp.float32)).astype(jnp.bfloat16)
            s = jnp.dot(v_hi, seg, preferred_element_type=jnp.float32)
            return s + jnp.dot(v_lo, seg, preferred_element_type=jnp.float32)
        # bf16 activations: the lo pass is dead — single MXU pass.
        return jnp.dot(v.astype(jnp.bfloat16), seg,
                       preferred_element_type=jnp.float32)

    inv_d = jnp.float32(1.0 / d)
    mean = seg_sum(x) * inv_d                # per-row mean, broadcast over row
    c = x - mean
    var = seg_sum(c * c) * inv_d             # two-pass (centered) variance
    scale = lax.rsqrt(var + eps) * g
    if bf16_epilogue:
        y = (c.astype(jnp.bfloat16) * scale.astype(jnp.bfloat16)
             + b.astype(jnp.bfloat16))
    else:
        y = c * scale + b
    o_ref[...] = y.astype(o_ref.dtype)


def _layernorm_row_kernel(x_ref, g_ref, b_ref, o_ref, *, eps, bf16_epilogue):
    """Fallback for feature dims that can't be lane-packed to 128."""
    x = x_ref[...].astype(jnp.float32)
    g = g_ref[...].astype(jnp.float32)
    b = b_ref[...].astype(jnp.float32)
    mean = jnp.mean(x, axis=-1, keepdims=True)
    c = x - mean
    var = jnp.mean(c * c, axis=-1, keepdims=True)
    scale = lax.rsqrt(var + eps) * g
    if bf16_epilogue:
        y = (c.astype(jnp.bfloat16) * scale.astype(jnp.bfloat16)
             + b.astype(jnp.bfloat16))
    else:
        y = c * scale + b
    o_ref[...] = y.astype(o_ref.dtype)


def normalization_forward(x, gamma, beta, *, target_tile_bytes=1 << 20):
    """Equivalent of Normalization(embedding_dim)(x) from agentEncoder.py."""
    orig_shape = x.shape
    d = int(orig_shape[-1])
    x2d = x.reshape(-1, d)
    rows = x2d.shape[0]

    itemsize = jnp.dtype(x.dtype).itemsize
    hi_lo = itemsize >= 4                                   # f32 activations
    bf16_epi = jnp.dtype(x.dtype) == jnp.dtype(jnp.bfloat16)

    # ---- lane packing: D < 128 dividing 128 -> pack 128//D logical rows into
    # one 128-lane register row via a free row-major reshape (lane-dense
    # loads/stores, no masked vst.msk).
    use_seg = (d <= 128) and (128 % d == 0)
    pack = 128 // d if use_seg else 1
    dp = d * pack

    # ---- row-tile sizing -----------------------------------------------------
    row_bytes = dp * itemsize
    tm_cap = max(32, (target_tile_bytes // row_bytes) // 32 * 32)

    prows = pl.cdiv(rows, pack)                 # packed rows needed
    if prows <= 64:
        # Tiny input: one aligned full-extent block (pad cost negligible).
        prows_p = pl.cdiv(prows, 32) * 32
        tm = prows_p
    else:
        # No pad-to-tile-multiple: ragged last block (Pallas masks it, and the
        # seg matmul never mixes packed rows so garbage can't leak).  Force an
        # even step count so v7x's two TensorCores split the grid evenly.
        prows_p = prows
        steps = pl.cdiv(prows, tm_cap)
        steps = steps + (steps % 2)
        tm = min(tm_cap, pl.cdiv(pl.cdiv(prows, steps), 32) * 32)

    rows_p = prows_p * pack
    if rows_p != rows:
        # Only pack-granularity / tiny-input padding ever reaches this point.
        x2d = jnp.pad(x2d, ((0, rows_p - rows), (0, 0)))
    xp = x2d.reshape(prows_p, dp)               # lane-dense packed view (free)
    gp = jnp.tile(gamma.reshape(1, d), (1, pack))   # (1, DP) packed affine
    bp = jnp.tile(beta.reshape(1, d), (1, pack))

    grid = (pl.cdiv(prows_p, tm),)

    # ---- explicit VMEM budget: 2x double-buffered input + 2x output blocks,
    # ~4 live f32 block temporaries, small constants, 4 MiB headroom for
    # Mosaic scratch; capped generation-aware (v7x: 64 MiB per TensorCore).
    tile_bytes = tm * dp * itemsize
    f32_tile_bytes = tm * dp * 4
    needed = 4 * tile_bytes + 4 * f32_tile_bytes + dp * dp * 2 + (4 << 20)
    try:
        vmem_cap = int(pltpu.get_tpu_info().vmem_capacity_bytes)
    except Exception:
        vmem_cap = 64 << 20                     # conservative (v7x per-core)
    vmem_limit = int(min(vmem_cap * 3 // 4, max(16 << 20, needed)))

    cparams = pltpu.CompilerParams(
        dimension_semantics=("parallel",),
        vmem_limit_bytes=vmem_limit,
    )

    if use_seg:
        # Block-diagonal 0/1 segment matrix: seg[i, j] = 1 iff lanes i and j
        # belong to the same logical row.  Hoisted out of the kernel; constant
        # index_map means it is DMA'd once, not re-materialized per grid step.
        lane = np.arange(dp) // d
        seg = jnp.asarray(lane[:, None] == lane[None, :], dtype=jnp.bfloat16)
        kernel = functools.partial(_layernorm_seg_kernel, d=d, eps=EPS,
                                   hi_lo=hi_lo, bf16_epilogue=bf16_epi)
        in_specs = [
            pl.BlockSpec((tm, dp), lambda i: (i, 0)),
            pl.BlockSpec((1, dp), lambda i: (0, 0)),
            pl.BlockSpec((1, dp), lambda i: (0, 0)),
            pl.BlockSpec((dp, dp), lambda i: (0, 0)),
        ]
        args = (xp, gp, bp, seg)
    else:
        # TODO(synk): for D not dividing 128 (or D >= 128), repack features /
        # use a ones-vector MXU reduction to avoid XLU reduces + masked stores.
        kernel = functools.partial(_layernorm_row_kernel, eps=EPS,
                                   bf16_epilogue=bf16_epi)
        in_specs = [
            pl.BlockSpec((tm, dp), lambda i: (i, 0)),
            pl.BlockSpec((1, dp), lambda i: (0, 0)),
            pl.BlockSpec((1, dp), lambda i: (0, 0)),
        ]
        args = (xp, gp, bp)

    outp = pl.pallas_call(
        kernel,
        out_shape=jax.ShapeDtypeStruct((prows_p, dp), x.dtype),
        grid_spec=pltpu.PrefetchScalarGridSpec(
            num_scalar_prefetch=0,
            grid=grid,
            in_specs=in_specs,
            out_specs=pl.BlockSpec((tm, dp), lambda i: (i, 0)),
        ),
        compiler_params=cparams,
    )(*args)

    out2d = outp.reshape(rows_p, d)
    if rows_p != rows:
        out2d = out2d[:rows]
    return out2d.reshape(orig_shape)


if __name__ == "__main__":
    embedding_dim = 32
    batch, seq = 2, 8

    key = jax.random.PRNGKey(0)
    kx, kg, kb = jax.random.split(key, 3)
    x = jax.random.normal(kx, (batch, seq, embedding_dim), dtype=jnp.float32)
    # nn.LayerNorm default init is weight=1 / bias=0; use non-trivial affine
    # params here to also exercise the packed gamma/beta path.
    gamma = 1.0 + 0.1 * jax.random.normal(kg, (embedding_dim,), dtype=jnp.float32)
    beta = 0.1 * jax.random.normal(kb, (embedding_dim,), dtype=jnp.float32)

    out = normalization_forward(x, gamma, beta)
    out = jax.block_until_ready(out)

    # Pure-JAX reference of the same math.
    x32 = x.astype(jnp.float32)
    mean = jnp.mean(x32, axis=-1, keepdims=True)
    var = jnp.mean((x32 - mean) ** 2, axis=-1, keepdims=True)
    ref = (x32 - mean) * lax.rsqrt(var + EPS) * gamma + beta

    err = jnp.max(jnp.abs(out - ref))
    assert out.shape == x.shape, "shape mismatch"
    assert err < 1e-4, f"mismatch vs reference: {err}"

    print("KERNEL_OK")
</pallas_src>

<mosaic_0001>
module attributes {stable_mosaic.version = 11 : i64} {
  func.func @_layernorm_seg_kernel(%arg0: i32, %arg1: memref<32x128xf32, #tpu.memory_space<vmem>>, %arg2: memref<1x128xf32, #tpu.memory_space<vmem>>, %arg3: memref<1x128xf32, #tpu.memory_space<vmem>>, %arg4: memref<128x128xbf16, #tpu.memory_space<vmem>>, %arg5: memref<32x128xf32, #tpu.memory_space<vmem>>) attributes {dimension_semantics = [#tpu.dimension_semantics<parallel>], iteration_bounds = array<i64: 1>, scalar_prefetch = 0 : i64, scratch_operands = 0 : i64, tpu.core_type = #tpu.core_type<tc>, window_params = [{transform_indices = @transform_0, window_bounds = array<i64: 32, 128>}, {pipeline_mode = #tpu.pipeline_mode<synchronous>, transform_indices = @transform_1, window_bounds = array<i64: 1, 128>}, {pipeline_mode = #tpu.pipeline_mode<synchronous>, transform_indices = @transform_2, window_bounds = array<i64: 1, 128>}, {pipeline_mode = #tpu.pipeline_mode<synchronous>, transform_indices = @transform_3, window_bounds = array<i64: 128, 128>}, {transform_indices = @transform_4, window_bounds = array<i64: 32, 128>}]} {
    %c0 = arith.constant 0 : index
    %c0_0 = arith.constant 0 : index
    %0 = vector.load %arg1[%c0, %c0_0] : memref<32x128xf32, #tpu.memory_space<vmem>>, vector<32x128xf32>
    %c0_1 = arith.constant 0 : index
    %c0_2 = arith.constant 0 : index
    %1 = vector.load %arg2[%c0_1, %c0_2] : memref<1x128xf32, #tpu.memory_space<vmem>>, vector<1x128xf32>
    %c0_3 = arith.constant 0 : index
    %c0_4 = arith.constant 0 : index
    %2 = vector.load %arg3[%c0_3, %c0_4] : memref<1x128xf32, #tpu.memory_space<vmem>>, vector<1x128xf32>
    %c0_5 = arith.constant 0 : index
    %c0_6 = arith.constant 0 : index
    %3 = vector.load %arg4[%c0_5, %c0_6] : memref<128x128xbf16, #tpu.memory_space<vmem>>, vector<128x128xbf16>
    %4 = arith.truncf %0 : vector<32x128xf32> to vector<32x128xbf16>
    %5 = arith.extf %4 : vector<32x128xbf16> to vector<32x128xf32>
    %6 = arith.subf %0, %5 : vector<32x128xf32>
    %7 = arith.truncf %6 : vector<32x128xf32> to vector<32x128xbf16>
    %cst = arith.constant dense<0.000000e+00> : vector<32x128xf32>
    %8 = tpu.matmul %4, %3, %cst {dimension_numbers = #tpu.dot_dimension_numbers<[1], [0], [0], [1], [0, 0, 1, 1], [], []>} : vector<32x128xbf16>, vector<128x128xbf16>, vector<32x128xf32> -> vector<32x128xf32>
    %cst_7 = arith.constant dense<0.000000e+00> : vector<32x128xf32>
    %9 = tpu.matmul %7, %3, %cst_7 {dimension_numbers = #tpu.dot_dimension_numbers<[1], [0], [0], [1], [0, 0, 1, 1], [], []>} : vector<32x128xbf16>, vector<128x128xbf16>, vector<32x128xf32> -> vector<32x128xf32>
    %10 = arith.addf %8, %9 : vector<32x128xf32>
    %cst_8 = arith.constant 3.125000e-02 : f32
    %11 = vector.broadcast %cst_8 : f32 to vector<32x128xf32>
    %12 = arith.mulf %10, %11 : vector<32x128xf32>
    %13 = arith.subf %0, %12 : vector<32x128xf32>
    %14 = arith.mulf %13, %13 : vector<32x128xf32>
    %15 = arith.truncf %14 : vector<32x128xf32> to vector<32x128xbf16>
    %16 = arith.extf %15 : vector<32x128xbf16> to vector<32x128xf32>
    %17 = arith.subf %14, %16 : vector<32x128xf32>
    %18 = arith.truncf %17 : vector<32x128xf32> to vector<32x128xbf16>
    %cst_9 = arith.constant dense<0.000000e+00> : vector<32x128xf32>
    %19 = tpu.matmul %15, %3, %cst_9 {dimension_numbers = #tpu.dot_dimension_numbers<[1], [0], [0], [1], [0, 0, 1, 1], [], []>} : vector<32x128xbf16>, vector<128x128xbf16>, vector<32x128xf32> -> vector<32x128xf32>
    %cst_10 = arith.constant dense<0.000000e+00> : vector<32x128xf32>
    %20 = tpu.matmul %18, %3, %cst_10 {dimension_numbers = #tpu.dot_dimension_numbers<[1], [0], [0], [1], [0, 0, 1, 1], [], []>} : vector<32x128xbf16>, vector<128x128xbf16>, vector<32x128xf32> -> vector<32x128xf32>
    %21 = arith.addf %19, %20 : vector<32x128xf32>
    %cst_11 = arith.constant 3.125000e-02 : f32
    %22 = vector.broadcast %cst_11 : f32 to vector<32x128xf32>
    %23 = arith.mulf %21, %22 : vector<32x128xf32>
    %cst_12 = arith.constant 9.99999974E-6 : f32
    %24 = vector.broadcast %cst_12 : f32 to vector<32x128xf32>
    %25 = arith.addf %23, %24 : vector<32x128xf32>
    %26 = math.rsqrt %25 : vector<32x128xf32>
    %27 = vector.broadcast %1 : vector<1x128xf32> to vector<32x128xf32>
    %28 = arith.mulf %26, %27 : vector<32x128xf32>
    %29 = arith.mulf %13, %28 : vector<32x128xf32>
    %30 = vector.broadcast %2 : vector<1x128xf32> to vector<32x128xf32>
    %31 = arith.addf %29, %30 : vector<32x128xf32>
    %c0_13 = arith.constant 0 : index
    %c0_14 = arith.constant 0 : index
    %32 = vector.load %arg5[%c0_13, %c0_14] : memref<32x128xf32, #tpu.memory_space<vmem>>, vector<32x128xf32>
    tpu.vector_store %arg5[%c0_13, %c0_14], %31 {strides = array<i32>} : memref<32x128xf32, #tpu.memory_space<vmem>>, vector<32x128xf32>,
    return
  }
  func.func @transform_0(%arg0: i32) -> (i32, i32) {
    %c0_i32 = arith.constant 0 : i32
    %c0_i32_0 = arith.constant 0 : i32
    return %arg0, %c0_i32 : i32, i32
  }
  func.func @transform_1(%arg0: i32) -> (i32, i32) {
    %c0_i32 = arith.constant 0 : i32
    %c0_i32_0 = arith.constant 0 : i32
    %c0_i32_1 = arith.constant 0 : i32
    return %c0_i32, %c0_i32_0 : i32, i32
  }
  func.func @transform_2(%arg0: i32) -> (i32, i32) {
    %c0_i32 = arith.constant 0 : i32
    %c0_i32_0 = arith.constant 0 : i32
    %c0_i32_1 = arith.constant 0 : i32
    return %c0_i32, %c0_i32_0 : i32, i32
  }
  func.func @transform_3(%arg0: i32) -> (i32, i32) {
    %c0_i32 = arith.constant 0 : i32
    %c0_i32_0 = arith.constant 0 : i32
    %c0_i32_1 = arith.constant 0 : i32
    return %c0_i32, %c0_i32_0 : i32, i32
  }
  func.func @transform_4(%arg0: i32) -> (i32, i32) {
    %c0_i32 = arith.constant 0 : i32
    %c0_i32_0 = arith.constant 0 : i32
    return %arg0, %c0_i32 : i32, i32
  }
}

</mosaic_0001>

<llo_original>
// kernel: tpu_custom_call.1
$region0: #{tpu_custom_call.1}
  #allocation0 [shape = 'u32[]', space=smem, size = 0x4, offset = 0x4, fixed_abs, tag = 'smem constant byte address 0x4 - core index']
  #allocation1 [shape = 'u32[144,128]{1,0:T(1,128)}', space=vmem, size = 0x12000, scoped, tag = 'internal scratch']
  %s0 = inlined_call_operand.hbm [shape: f32[32,128], index: 0, kind: input, shape index: {}]
  %s1 = inlined_call_operand.vmem [shape: f32[1,128], index: 1, kind: input, shape index: {}]
  %s2 = inlined_call_operand.vmem [shape: f32[1,128], index: 2, kind: input, shape index: {}]
  %s3 = inlined_call_operand.hbm [shape: bf16[128,128], index: 3, kind: input, shape index: {}]
  %s4 = inlined_call_operand.hbm [shape: f32[32,128], index: 4, kind: output, shape index: {}]
  %s5 = sld [smem:[#allocation0]]
  $region34: #{tpu_custom_call.1} parent=0
    _
  %s7 = ssub.s32 1, %s5
  %s8 = scalar_select 0, %s7, %s5
  $region1: #{tpu_custom_call.1} parent=0
    #allocation2 [shape = 'u8[16384]{0}', space=vmem, size = 0x4000, scoped, tag = 'input window, operand 0, single buffered']
    #allocation3 [shape = 's32[1]{0}', space=sflag, size = 0x4, scoped, tag = 'scoped memory for tpu_custom_call.1']
    #allocation4 [shape = 's32[1]{0}', space=sflag, size = 0x4, scoped, tag = 'scoped memory for tpu_custom_call.1']
    #allocation5 [shape = 'u8[32768]{0}', space=vmem, size = 0x8000, scoped, tag = 'input window, operand 3, single buffered']
    #allocation6 [shape = 's32[1]{0}', space=sflag, size = 0x4, scoped, tag = 'scoped memory for tpu_custom_call.1']
    #allocation7 [shape = 'u8[16384]{0}', space=vmem, size = 0x4000, scoped, tag = 'output window, operand 0, single buffered']
    %9 = vsyncpa [#allocation3], 0
    %10 = vsyncpa [#allocation6], 0
    %11 = vsyncpa [#allocation4], 0
    // Predicated region
    $region2: #{tpu_custom_call.1} parent=1 // pred_check
      _
    $region3: #{tpu_custom_call.1} parent=1 // pred_check_branch
      %13 = sbr.rel (0) target = $region5
    $region4: #{tpu_custom_call.1} parent=1 // pred_region
      %s15 = ssub.s32 512, 512
      %16 = vsyncadd [#allocation3], %s15
      %s17 = sshll.u32 [#allocation2], 4
      %s18 = int_to_ptr.vmem [resolvable:$true] %s17
      %23 = dma.hbm_to_vmem [thread:$0]  %s0, 512, %s18, [#allocation3], 128, 128, 8
    $region5: #{tpu_custom_call.1} parent=1 // pred_fallthru
      _
    // Predicated region
    $region6: #{tpu_custom_call.1} parent=1 // pred_check
      _
    $region7: #{tpu_custom_call.1} parent=1 // pred_check_branch
      %25 = sbr.rel (0) target = $region9
    $region8: #{tpu_custom_call.1} parent=1 // pred_region
      _
    $region9: #{tpu_custom_call.1} parent=1 // pred_fallthru
      _
    // Predicated region
    $region10: #{tpu_custom_call.1} parent=1 // pred_check
      _
    $region11: #{tpu_custom_call.1} parent=1 // pred_check_branch
      %27 = sbr.rel (0) target = $region13
    $region12: #{tpu_custom_call.1} parent=1 // pred_region
      _
    $region13: #{tpu_custom_call.1} parent=1 // pred_fallthru
      _
    // Predicated region
    $region14: #{tpu_custom_call.1} parent=1 // pred_check
      _
    $region15: #{tpu_custom_call.1} parent=1 // pred_check_branch
      %29 = sbr.rel (0) target = $region17
    $region16: #{tpu_custom_call.1} parent=1 // pred_region
      %s31 = ssub.s32 1024, 1024
      %32 = vsyncadd [#allocation6], %s31
      %s33 = sshll.u32 [#allocation5], 4
      %s34 = int_to_ptr.vmem [resolvable:$true] %s33
      %39 = dma.hbm_to_vmem [thread:$0]  %s3, 1024, %s34, [#allocation6], 64, 64, 4
    $region17: #{tpu_custom_call.1} parent=1 // pred_fallthru
      _
    // Predicated region
    $region18: #{tpu_custom_call.1} parent=1 // pred_check
      _
    $region19: #{tpu_custom_call.1} parent=1 // pred_check_branch
      %41 = sbr.rel (0) target = $region21
    $region20: #{tpu_custom_call.1} parent=1 // pred_region
      %42 = dma.done [#allocation3], 512
    $region21: #{tpu_custom_call.1} parent=1 // pred_fallthru
      _
    // Predicated region
    $region22: #{tpu_custom_call.1} parent=1 // pred_check
      _
    $region23: #{tpu_custom_call.1} parent=1 // pred_check_branch
      %44 = sbr.rel (0) target = $region25
    $region24: #{tpu_custom_call.1} parent=1 // pred_region
      %45 = dma.done [#allocation6], 1024
    $region25: #{tpu_custom_call.1} parent=1 // pred_fallthru
      _
    %v47 = vld [vmem:[#allocation2] sm:$0xff]
    %v48 = vld [vmem:[#allocation2 + $0x8] sm:$0xff]
    %v49 = vld [vmem:[#allocation2 + $0x10] sm:$0xff]
    %v50 = vld [vmem:[#allocation2 + $0x18] sm:$0xff]
    %v51 = vld [vmem:[%s1] sm:$0x1]
    %v52 = vld [vmem:[%s2] sm:$0x1]
    %v53 = vld [vmem:[#allocation5] sm:$0xf]
    %v54 = vld [vmem:[#allocation5 + $0x4] sm:$0xf]
    %v55 = vld [vmem:[#allocation5 + $0x8] sm:$0xf]
    %v56 = vld [vmem:[#allocation5 + $0xc] sm:$0xf]
    %v57 = vld [vmem:[#allocation5 + $0x10] sm:$0xf]
    %v58 = vld [vmem:[#allocation5 + $0x14] sm:$0xf]
    %v59 = vld [vmem:[#allocation5 + $0x18] sm:$0xf]
    %v60 = vld [vmem:[#allocation5 + $0x1c] sm:$0xf]
    %v61 = vld [vmem:[#allocation5 + $0x20] sm:$0xf]
    %v62 = vld [vmem:[#allocation5 + $0x24] sm:$0xf]
    %v63 = vld [vmem:[#allocation5 + $0x28] sm:$0xf]
    %v64 = vld [vmem:[#allocation5 + $0x2c] sm:$0xf]
    %v65 = vld [vmem:[#allocation5 + $0x30] sm:$0xf]
    %v66 = vld [vmem:[#allocation5 + $0x34] sm:$0xf]
    %v67 = vld [vmem:[#allocation5 + $0x38] sm:$0xf]
    %v68 = vld [vmem:[#allocation5 + $0x3c] sm:$0xf]
    %v69 = vpack.c.bf16 %v48, %v47
    %v70 = vpack.c.bf16 %v50, %v49
    %v71 = vunpack.c.l.bf16 %v69
    %v72 = vunpack.c.h.bf16 %v69
    %v73 = vunpack.c.l.bf16 %v70
    %v74 = vunpack.c.h.bf16 %v70
    %v75 = vsub.f32 %v47, %v71
    %v76 = vsub.f32 %v48, %v72
    %v77 = vsub.f32 %v49, %v73
    %v78 = vsub.f32 %v50, %v74
    %v79 = vpack.c.bf16 %v76, %v75
    %v80 = vpack.c.bf16 %v78, %v77
    %v97 = vunpack.c.l.b16 %v53
    %v98 = vunpack.c.l.b16 %v54
    %v99 = vunpack.c.l.b16 %v55
    %v100 = vunpack.c.l.b16 %v56
    %v101 = vunpack.c.l.b16 %v57
    %v102 = vunpack.c.l.b16 %v58
    %v103 = vunpack.c.l.b16 %v59
    %v104 = vunpack.c.l.b16 %v60
    %v105 = vunpack.c.l.b16 %v61
    %v106 = vunpack.c.l.b16 %v62
    %v107 = vunpack.c.l.b16 %v63
    %v108 = vunpack.c.l.b16 %v64
    %v109 = vunpack.c.l.b16 %v65
    %v110 = vunpack.c.l.b16 %v66
    %v111 = vunpack.c.l.b16 %v67
    %v112 = vunpack.c.l.b16 %v68
    %v113 = vpack.c.b16 %v98, %v97
    %v114 = vpack.c.b16 %v100, %v99
    %v115 = vpack.c.b16 %v102, %v101
    %v116 = vpack.c.b16 %v104, %v103
    %v117 = vpack.c.b16 %v106, %v105
    %v118 = vpack.c.b16 %v108, %v107
    %v119 = vpack.c.b16 %v110, %v109
    %v120 = vpack.c.b16 %v112, %v111
    %129 = vmatprep.subr.bf16.mxu0 0
    %130 = vmatpush1.bf16.msra.mxu0 %v113
    %131 = vmatprep.subr.bf16.mxu0 0
    %132 = vmatpush1.bf16.msra.mxu0 %v114
    %133 = vmatprep.subr.bf16.mxu0 0
    %134 = vmatpush1.bf16.msra.mxu0 %v115
    %135 = vmatprep.subr.bf16.mxu0 0
    %136 = vmatpush1.bf16.msra.mxu0 %v116
    %137 = vmatprep.subr.bf16.mxu0 0
    %138 = vmatpush1.bf16.msra.mxu0 %v117
    %139 = vmatprep.subr.bf16.mxu0 0
    %140 = vmatpush1.bf16.msra.mxu0 %v118
    %141 = vmatprep.subr.bf16.mxu0 0
    %142 = vmatpush1.bf16.msra.mxu0 %v119
    %143 = vmatprep.subr.bf16.mxu0 0
    %144 = vmatpush1.bf16.msra.mxu0 %v120
    %145 = vmatprep.subr.bf16.mxu0 0
    %146 = vmatpush1.bf16.msra.mxu0 0
    %147 = vmatprep.subr.bf16.mxu0 0
    %148 = vmatpush1.bf16.msra.mxu0 0
    %149 = vmatprep.subr.bf16.mxu0 0
    %150 = vmatpush1.bf16.msra.mxu0 0
    %151 = vmatprep.subr.bf16.mxu0 0
    %152 = vmatpush1.bf16.msra.mxu0 0
    %153 = vmatprep.subr.bf16.mxu0 0
    %154 = vmatpush1.bf16.msra.mxu0 0
    %155 = vmatprep.subr.bf16.mxu0 0
    %156 = vmatpush1.bf16.msra.mxu0 0
    %157 = vmatprep.subr.bf16.mxu0 0
    %158 = vmatpush1.bf16.msra.mxu0 0
    %159 = vmatprep.subr.bf16.mxu0 0
    %160 = vmatpush1.bf16.msra.mxu0 0
    %161 = vmatprep.mubr.bf16.mxu0 0
    %162 = vmatmul.mubr.bf16.gmra.mrb[0].mxu0 %v79
    %v163 = vpop.f32.mrb[0].mxu0
    %v164 = vadd.f32 0.0, %v163
    %v165 = vpop.f32.mrb[0].mxu0
    %v166 = vpop.f32.mrb[0].mxu0
    %v167 = vadd.f32 0.0, %v166
    %v168 = vpop.f32.mrb[0].mxu0
    %169 = vmatprep.mubr.bf16.mxu0 0
    %170 = vmatmul.mubr.bf16.gmra.mrb[0].mxu0 %v80
    %v171 = vpop.f32.mrb[0].mxu0
    %v172 = vadd.f32 0.0, %v171
    %v173 = vpop.f32.mrb[0].mxu0
    %v174 = vpop.f32.mrb[0].mxu0
    %v175 = vadd.f32 0.0, %v174
    %v176 = vpop.f32.mrb[0].mxu0
    %177 = vdwg.mxu0
    %178 = vmatprep.subr.bf16.mxu0 0
    %179 = vmatpush1.bf16.msra.mxu0 %v113
    %180 = vmatprep.subr.bf16.mxu0 0
    %181 = vmatpush1.bf16.msra.mxu0 %v114
    %182 = vmatprep.subr.bf16.mxu0 0
    %183 = vmatpush1.bf16.msra.mxu0 %v115
    %184 = vmatprep.subr.bf16.mxu0 0
    %185 = vmatpush1.bf16.msra.mxu0 %v116
    %186 = vmatprep.subr.bf16.mxu0 0
    %187 = vmatpush1.bf16.msra.mxu0 %v117
    %188 = vmatprep.subr.bf16.mxu0 0
    %189 = vmatpush1.bf16.msra.mxu0 %v118
    %190 = vmatprep.subr.bf16.mxu0 0
    %191 = vmatpush1.bf16.msra.mxu0 %v119
    %192 = vmatprep.subr.bf16.mxu0 0
    %193 = vmatpush1.bf16.msra.mxu0 %v120
    %194 = vmatprep.subr.bf16.mxu0 0
    %195 = vmatpush1.bf16.msra.mxu0 0
    %196 = vmatprep.subr.bf16.mxu0 0
    %197 = vmatpush1.bf16.msra.mxu0 0
    %198 = vmatprep.subr.bf16.mxu0 0
    %199 = vmatpush1.bf16.msra.mxu0 0
    %200 = vmatprep.subr.bf16.mxu0 0
    %201 = vmatpush1.bf16.msra.mxu0 0
    %202 = vmatprep.subr.bf16.mxu0 0
    %203 = vmatpush1.bf16.msra.mxu0 0
    %204 = vmatprep.subr.bf16.mxu0 0
    %205 = vmatpush1.bf16.msra.mxu0 0
    %206 = vmatprep.subr.bf16.mxu0 0
    %207 = vmatpush1.bf16.msra.mxu0 0
    %208 = vmatprep.subr.bf16.mxu0 0
    %209 = vmatpush1.bf16.msra.mxu0 0
    %210 = vmatprep.mubr.bf16.mxu0 0
    %211 = vmatmul.mubr.bf16.gmra.mrb[0].mxu0 %v69
    %v212 = vpop.f32.mrb[0].mxu0
    %v213 = vadd.f32 %v164, %v212
    %v214 = vpop.f32.mrb[0].mxu0
    %v215 = vpop.f32.mrb[0].mxu0
    %v216 = vadd.f32 %v167, %v215
    %v217 = vpop.f32.mrb[0].mxu0
    %218 = vmatprep.mubr.bf16.mxu0 0
    %219 = vmatmul.mubr.bf16.gmra.mrb[0].mxu0 %v70
    %v220 = vpop.f32.mrb[0].mxu0
    %v221 = vadd.f32 %v172, %v220
    %v222 = vpop.f32.mrb[0].mxu0
    %v223 = vpop.f32.mrb[0].mxu0
    %v224 = vadd.f32 %v175, %v223
    %v225 = vpop.f32.mrb[0].mxu0
    %226 = vdwg.mxu0
    %v227 = vmul.f32 %v213, 0.03125
    %v228 = vmul.f32 %v216, 0.03125
    %v229 = vmul.f32 %v221, 0.03125
    %v230 = vmul.f32 %v224, 0.03125
    %v231 = vsub.f32 %v47, %v227
    %v232 = vsub.f32 %v48, %v228
    %v233 = vsub.f32 %v49, %v229
    %v234 = vsub.f32 %v50, %v230
    %v235 = vmul.f32 %v231, %v231
    %v236 = vmul.f32 %v232, %v232
    %v237 = vmul.f32 %v233, %v233
    %v238 = vmul.f32 %v234, %v234
    %v239 = vpack.c.bf16 %v236, %v235
    %v240 = vpack.c.bf16 %v238, %v237
    %v241 = vunpack.c.l.bf16 %v239
    %v242 = vunpack.c.h.bf16 %v239
    %v243 = vunpack.c.l.bf16 %v240
    %v244 = vunpack.c.h.bf16 %v240
    %v245 = vsub.f32 %v235, %v241
    %v246 = vsub.f32 %v236, %v242
    %v247 = vsub.f32 %v237, %v243
    %v248 = vsub.f32 %v238, %v244
    %v249 = vpack.c.bf16 %v246, %v245
    %v250 = vpack.c.bf16 %v248, %v247
    %251 = vmatprep.subr.bf16.mxu0 0
    %252 = vmatpush1.bf16.msra.mxu0 %v113
    %253 = vmatprep.subr.bf16.mxu0 0
    %254 = vmatpush1.bf16.msra.mxu0 %v114
    %255 = vmatprep.subr.bf16.mxu0 0
    %256 = vmatpush1.bf16.msra.mxu0 %v115
    %257 = vmatprep.subr.bf16.mxu0 0
    %258 = vmatpush1.bf16.msra.mxu0 %v116
    %259 = vmatprep.subr.bf16.mxu0 0
    %260 = vmatpush1.bf16.msra.mxu0 %v117
    %261 = vmatprep.subr.bf16.mxu0 0
    %262 = vmatpush1.bf16.msra.mxu0 %v118
    %263 = vmatprep.subr.bf16.mxu0 0
    %264 = vmatpush1.bf16.msra.mxu0 %v119
    %265 = vmatprep.subr.bf16.mxu0 0
    %266 = vmatpush1.bf16.msra.mxu0 %v120
    %267 = vmatprep.subr.bf16.mxu0 0
    %268 = vmatpush1.bf16.msra.mxu0 0
    %269 = vmatprep.subr.bf16.mxu0 0
    %270 = vmatpush1.bf16.msra.mxu0 0
    %271 = vmatprep.subr.bf16.mxu0 0
    %272 = vmatpush1.bf16.msra.mxu0 0
    %273 = vmatprep.subr.bf16.mxu0 0
    %274 = vmatpush1.bf16.msra.mxu0 0
    %275 = vmatprep.subr.bf16.mxu0 0
    %276 = vmatpush1.bf16.msra.mxu0 0
    %277 = vmatprep.subr.bf16.mxu0 0
    %278 = vmatpush1.bf16.msra.mxu0 0
    %279 = vmatprep.subr.bf16.mxu0 0
    %280 = vmatpush1.bf16.msra.mxu0 0
    %281 = vmatprep.subr.bf16.mxu0 0
    %282 = vmatpush1.bf16.msra.mxu0 0
    %283 = vmatprep.mubr.bf16.mxu0 0
    %284 = vmatmul.mubr.bf16.gmra.mrb[0].mxu0 %v249
    %v285 = vpop.f32.mrb[0].mxu0
    %v286 = vadd.f32 0.0, %v285
    %v287 = vpop.f32.mrb[0].mxu0
    %v288 = vpop.f32.mrb[0].mxu0
    %v289 = vadd.f32 0.0, %v288
    %v290 = vpop.f32.mrb[0].mxu0
    %291 = vmatprep.mubr.bf16.mxu0 0
    %292 = vmatmul.mubr.bf16.gmra.mrb[0].mxu0 %v250
    %v293 = vpop.f32.mrb[0].mxu0
    %v294 = vadd.f32 0.0, %v293
    %v295 = vpop.f32.mrb[0].mxu0
    %v296 = vpop.f32.mrb[0].mxu0
    %v297 = vadd.f32 0.0, %v296
    %v298 = vpop.f32.mrb[0].mxu0
    %299 = vdwg.mxu0
    %300 = vmatprep.subr.bf16.mxu0 0
    %301 = vmatpush1.bf16.msra.mxu0 %v113
    %302 = vmatprep.subr.bf16.mxu0 0
    %303 = vmatpush1.bf16.msra.mxu0 %v114
    %304 = vmatprep.subr.bf16.mxu0 0
    %305 = vmatpush1.bf16.msra.mxu0 %v115
    %306 = vmatprep.subr.bf16.mxu0 0
    %307 = vmatpush1.bf16.msra.mxu0 %v116
    %308 = vmatprep.subr.bf16.mxu0 0
    %309 = vmatpush1.bf16.msra.mxu0 %v117
    %310 = vmatprep.subr.bf16.mxu0 0
    %311 = vmatpush1.bf16.msra.mxu0 %v118
    %312 = vmatprep.subr.bf16.mxu0 0
    %313 = vmatpush1.bf16.msra.mxu0 %v119
    %314 = vmatprep.subr.bf16.mxu0 0
    %315 = vmatpush1.bf16.msra.mxu0 %v120
    %316 = vmatprep.subr.bf16.mxu0 0
    %317 = vmatpush1.bf16.msra.mxu0 0
    %318 = vmatprep.subr.bf16.mxu0 0
    %319 = vmatpush1.bf16.msra.mxu0 0
    %320 = vmatprep.subr.bf16.mxu0 0
    %321 = vmatpush1.bf16.msra.mxu0 0
    %322 = vmatprep.subr.bf16.mxu0 0
    %323 = vmatpush1.bf16.msra.mxu0 0
    %324 = vmatprep.subr.bf16.mxu0 0
    %325 = vmatpush1.bf16.msra.mxu0 0
    %326 = vmatprep.subr.bf16.mxu0 0
    %327 = vmatpush1.bf16.msra.mxu0 0
    %328 = vmatprep.subr.bf16.mxu0 0
    %329 = vmatpush1.bf16.msra.mxu0 0
    %330 = vmatprep.subr.bf16.mxu0 0
    %331 = vmatpush1.bf16.msra.mxu0 0
    %332 = vmatprep.mubr.bf16.mxu0 0
    %333 = vmatmul.mubr.bf16.gmra.mrb[0].mxu0 %v239
    %v334 = vpop.f32.mrb[0].mxu0
    %v335 = vadd.f32 %v286, %v334
    %v336 = vpop.f32.mrb[0].mxu0
    %v337 = vpop.f32.mrb[0].mxu0
    %v338 = vadd.f32 %v289, %v337
    %v339 = vpop.f32.mrb[0].mxu0
    %340 = vmatprep.mubr.bf16.mxu0 0
    %341 = vmatmul.mubr.bf16.gmra.mrb[0].mxu0 %v240
    %v342 = vpop.f32.mrb[0].mxu0
    %v343 = vadd.f32 %v294, %v342
    %v344 = vpop.f32.mrb[0].mxu0
    %v345 = vpop.f32.mrb[0].mxu0
    %v346 = vadd.f32 %v297, %v345
    %v347 = vpop.f32.mrb[0].mxu0
    %348 = vdwg.mxu0
    %v349 = vmul.f32 %v335, 0.03125
    %v350 = vmul.f32 %v338, 0.03125
    %v351 = vmul.f32 %v343, 0.03125
    %v352 = vmul.f32 %v346, 0.03125
    %v353 = vadd.f32 %v349, 1e-05
    %v354 = vadd.f32 %v350, 1e-05
    %v355 = vadd.f32 %v351, 1e-05
    %v356 = vadd.f32 %v352, 1e-05
    %v357 = vrsqrt.pop %v353
    %v358 = vrsqrt.pop %v354
    %v359 = vrsqrt.pop %v355
    %v360 = vrsqrt.pop %v356
    %v362 = vlaneseq
    %v363 = vshrl.u32 %v362, 7
    %v364 = vsub.s32 0, %v363
    %v365 = vrot.slane %v51, %v364
    %v367 = vmul.f32 %v357, %v365
    %v368 = vmul.f32 %v358, %v365
    %v369 = vmul.f32 %v359, %v365
    %v370 = vmul.f32 %v360, %v365
    %v371 = vmul.f32 %v231, %v367
    %v372 = vmul.f32 %v232, %v368
    %v373 = vmul.f32 %v233, %v369
    %v374 = vmul.f32 %v234, %v370
    %v376 = vlaneseq
    %v377 = vshrl.u32 %v376, 7
    %v378 = vsub.s32 0, %v377
    %v379 = vrot.slane %v52, %v378
    %v381 = vadd.f32 %v371, %v379
    %v382 = vadd.f32 %v372, %v379
    %v383 = vadd.f32 %v373, %v379
    %v384 = vadd.f32 %v374, %v379
    %385 = vst [vmem:[#allocation7] sm:$0xff] %v381
    %386 = vst [vmem:[#allocation7 + $0x8] sm:$0xff] %v382
    %387 = vst [vmem:[#allocation7 + $0x10] sm:$0xff] %v383
    %388 = vst [vmem:[#allocation7 + $0x18] sm:$0xff] %v384
    // Predicated region
    $region26: #{tpu_custom_call.1} parent=1 // pred_check
      _
    $region27: #{tpu_custom_call.1} parent=1 // pred_check_branch
      %390 = sbr.rel (0) target = $region29
    $region28: #{tpu_custom_call.1} parent=1 // pred_region
      %s392 = ssub.s32 512, 512
      %393 = vsyncadd [#allocation4], %s392
      %s394 = sshll.u32 [#allocation7], 4
      %s395 = int_to_ptr.vmem [resolvable:$true] %s394
      %400 = dma.vmem_to_hbm [thread:$0]  %s395, 512, %s4, [#allocation4], 128, 128, 8
    $region29: #{tpu_custom_call.1} parent=1 // pred_fallthru
      _
    // Predicated region
    $region30: #{tpu_custom_call.1} parent=1 // pred_check
      _
    $region31: #{tpu_custom_call.1} parent=1 // pred_check_branch
      %402 = sbr.rel (0) target = $region33
    $region32: #{tpu_custom_call.1} parent=1 // pred_region
      %403 = dma.done [#allocation4], 512
    $region33: #{tpu_custom_call.1} parent=1 // pred_fallthru
      _
    %404 = vsyncpa [#allocation3], 1
    %405 = vsyncpa [#allocation6], 1
    %406 = vsyncpa [#allocation4], 1

</llo_original>
